<compile_context>
chip_gen: v6e
topology: v6e:2x2x1
jax: 0.10.0
libtpu: 0.0.40
codegen_flags: <defaults>
</compile_context>

<pallas_src>
import functools

import jax
import jax.numpy as jnp
from jax import lax
from jax.experimental import pallas as pl
from jax.experimental.pallas import tpu as pltpu


# ----------------------------------------------------------------------------
# Pallas kernel: one grid step == one GTN channel (meta-path chain + GCN + gather)
# ----------------------------------------------------------------------------

def _gtn_core_kernel(target_ref, conv_ref, at_ref, x_ref, w_ref, o_ref, gcn_ref, *,
                     num_layers, num_channels, w_out, num_targets):
    """Fused GTN core for the channel selected by the grid.

    target_ref : SMEM (T,) int32            target node ids (scalar prefetch)
    conv_ref   : SMEM (num_convs*C, E) f32  softmaxed GTConv weights (scalar prefetch)
                 (convs 0,1 -> layer 0's conv1/conv2; conv i+1 -> layer i's conv1)
    at_ref     : VMEM (E, N, N) bf16        per-edge-type TRANSPOSED adjacency A[:,:,e].T
    x_ref      : VMEM (N, w_in)  f32        node features
    w_ref      : VMEM (w_in, w_out) f32     GCN weight
    o_ref      : VMEM (T, w_out) f32        this channel's relu(GCN) rows at target nodes
    gcn_ref    : VMEM (N, w_out) f32        scratch used for the row gather
    """
    ch = pl.program_id(0)
    e_types = at_ref.shape[0]
    n = at_ref.shape[1]

    # X @ W: tiny (N, w_in) x (w_in, w_out); recomputed per channel (negligible
    # vs. the (N,N) chain) so the channel axis stays a clean parallel grid dim.
    xw = jnp.dot(x_ref[...], w_ref[...], preferred_element_type=jnp.float32)
    xw_b = xw.astype(jnp.bfloat16)

    row = lax.broadcasted_iota(jnp.int32, (n, n), 0)
    col = lax.broadcasted_iota(jnp.int32, (n, n), 1)
    diag = row == col

    def gtconv_t(conv_idx):
        # conv_{conv_idx}(A)^T for this channel: E scalar*matrix FMAs on the VPU
        # (K == E ~ 4 would leave the MXU idle).  Edge-type slabs are indexed
        # one at a time so only one (N,N) slab is live per FMA; bf16 adjacency
        # is exact for 0/1 entries and is upcast so accumulation stays f32.
        acc = conv_ref[conv_idx * num_channels + ch, 0] * at_ref[0].astype(jnp.float32)
        for e in range(1, e_types):
            acc = acc + (conv_ref[conv_idx * num_channels + ch, e]
                         * at_ref[e].astype(jnp.float32))
        return acc

    def norm_t(g, add):
        # norm(H, add)^T given g = H^T: zero (or unit) diagonal, then scale row i
        # by 1/rowsum_i (== colsum_i of H), exact divide with the 1/0 -> 0 guard.
        gm = jnp.where(diag, jnp.float32(1.0 if add else 0.0), g)
        deg = jnp.sum(gm, axis=1, keepdims=True)                 # (N, 1)
        inv = 1.0 / jnp.where(deg == 0.0, jnp.float32(1.0), deg)
        inv = jnp.where(deg == 0.0, jnp.float32(0.0), inv)
        return gm * inv

    # Layer 0: H = conv1 @ conv2          ->  G = conv2^T @ conv1^T
    # (bf16 MXU operands, f32 accumulation.)
    g = jnp.dot(gtconv_t(1).astype(jnp.bfloat16),
                gtconv_t(0).astype(jnp.bfloat16),
                preferred_element_type=jnp.float32)
    # Layer i > 0: H = norm(H) @ conv_{i+1}   ->  G = conv_{i+1}^T @ norm_t(G)
    for i in range(1, num_layers):
        g = jnp.dot(gtconv_t(i + 1).astype(jnp.bfloat16),
                    norm_t(g, add=False).astype(jnp.bfloat16),
                    preferred_element_type=jnp.float32)

    # GCN: relu( norm(H, add=True)^T @ XW ) == relu( norm_t(G, True) @ XW ).
    gcn = jnp.dot(norm_t(g, add=True).astype(jnp.bfloat16), xw_b,
                  preferred_element_type=jnp.float32)
    gcn_ref[...] = jnp.maximum(gcn, 0.0)

    # Fused target-row gather: only |target_x| rows leave VMEM; the (N, C*w_out)
    # feature matrix is never written to HBM.  (T is small; unrolled loop.)
    for t in range(num_targets):
        idx = target_ref[t]
        o_ref[pl.ds(t, 1), :] = gcn_ref[pl.ds(idx, 1), :]


def _vmem_limit_bytes():
    # ~75% of physical VMEM, capped at 100 MiB: ~96 MiB on v5e/v6e (128 MiB
    # physical), ~48 MiB on v7x (64 MiB physical).  Safe fallback if the query
    # is unavailable.
    try:
        cap = int(pltpu.get_tpu_info().vmem_capacity_bytes)
    except Exception:
        cap = 64 * 1024 * 1024
    return int(min(cap * 3 // 4, 100 * 1024 * 1024))


def pallas_gtn_core(target_x, conv_w, a_t, x, w, *, num_layers, num_channels, w_out):
    e, n, _ = a_t.shape
    w_in = x.shape[1]
    t = target_x.shape[0]

    kernel = functools.partial(
        _gtn_core_kernel, num_layers=num_layers, num_channels=num_channels,
        w_out=w_out, num_targets=t)

    grid_spec = pltpu.PrefetchScalarGridSpec(
        num_scalar_prefetch=2,           # target_x, conv_w -> SMEM
        grid=(num_channels,),            # one grid step per channel
        in_specs=[
            # Same block index every step -> adjacency / X / W stay VMEM
            # resident across the channel loop (no re-DMA).
            pl.BlockSpec((e, n, n), lambda ch, tgt, cw: (0, 0, 0)),
            pl.BlockSpec((n, w_in), lambda ch, tgt, cw: (0, 0)),
            pl.BlockSpec((w_in, w_out), lambda ch, tgt, cw: (0, 0)),
        ],
        out_specs=pl.BlockSpec((None, t, w_out), lambda ch, tgt, cw: (ch, 0, 0)),
        scratch_shapes=[pltpu.VMEM((n, w_out), jnp.float32)],
    )
    return pl.pallas_call(
        kernel,
        out_shape=jax.ShapeDtypeStruct((num_channels, t, w_out), jnp.float32),
        grid_spec=grid_spec,
        compiler_params=pltpu.CompilerParams(
            # Channels are independent -> shard the channel axis across the two
            # TensorCores on v7x (near no-op on single-core v5e/v6e).
            dimension_semantics=("parallel",),
            vmem_limit_bytes=_vmem_limit_bytes(),
        ),
    )(target_x, conv_w, a_t, x, w)


# ----------------------------------------------------------------------------
# Parameters + forward glue (softmax / layout plumbing / tiny head in plain JAX)
# ----------------------------------------------------------------------------

def init_gtn_params(key, num_edge, num_channels, w_in, w_out, num_class, num_layers):
    keys = jax.random.split(key, num_layers * 2 + 5)
    layers = []
    k = 0
    for i in range(num_layers):
        if i == 0:
            layers.append({
                "w1": 0.1 + 0.05 * jax.random.normal(keys[k], (num_channels, num_edge), jnp.float32),
                "w2": 0.1 + 0.05 * jax.random.normal(keys[k + 1], (num_channels, num_edge), jnp.float32),
            })
            k += 2
        else:
            layers.append({
                "w1": 0.1 + 0.05 * jax.random.normal(keys[k], (num_channels, num_edge), jnp.float32),
            })
            k += 1
    xav = (6.0 / (w_in + w_out)) ** 0.5
    return {
        "layers": layers,
        "weight": jax.random.uniform(keys[k], (w_in, w_out), jnp.float32, -xav, xav),
        "bias": jnp.zeros((w_out,), jnp.float32),   # present in the module, unused in forward
        "lin1_w_t": 0.1 * jax.random.normal(keys[k + 1], (w_out * num_channels, w_out), jnp.float32),
        "lin1_b": 0.01 * jax.random.normal(keys[k + 2], (1, w_out), jnp.float32),
        "lin2_w_t": 0.1 * jax.random.normal(keys[k + 3], (w_out, num_class), jnp.float32),
        "lin2_b": 0.01 * jax.random.normal(keys[k + 4], (1, num_class), jnp.float32),
        "num_channels": num_channels,
        "w_out": w_out,
        "num_layers": num_layers,
    }


def gtn_forward(params, A, X, target_x):
    # A: (N, N, E) node x node x edge-type, X: (N, w_in)
    n_chan = params["num_channels"]
    w_out = params["w_out"]
    num_layers = params["num_layers"]
    n_edge = A.shape[2]
    n_tgt = target_x.shape[0]

    # Per-edge-type TRANSPOSED adjacency stack (E, N, N), a_t[e] = A[:, :, e].T,
    # stored bf16 (0/1 entries exact).  The whole meta-path chain is carried
    # transposed so every in-kernel matmul contracts on natural axes.
    # TODO(synk): at real N, accept A already in (E, N, N) transposed layout so
    # this full E*N^2 HBM transpose disappears from the per-forward path.
    a_t = jnp.transpose(A, (2, 1, 0)).astype(jnp.bfloat16)

    # Softmax over edge types of every GTConv weight, stacked (num_convs*C, E)
    # for SMEM.  Layer 0 owns convs 0 and 1; layer i>0 owns conv i+1.
    sms, Ws = [], []
    for i, layer in enumerate(params["layers"]):
        sm1 = jax.nn.softmax(layer["w1"], axis=1)
        if i == 0:
            sm2 = jax.nn.softmax(layer["w2"], axis=1)
            sms += [sm1, sm2]
            Ws.append([sm1.reshape(n_chan, n_edge, 1, 1),
                       sm2.reshape(n_chan, n_edge, 1, 1)])
        else:
            sms.append(sm1)
            Ws.append([sm1.reshape(n_chan, n_edge, 1, 1)])
    conv_w = jnp.concatenate(sms, axis=0).astype(jnp.float32)     # (num_convs*C, E)

    # Fused core: GTConv + bmm chain + norm + GCN + target-row gather.
    sel = pallas_gtn_core(target_x.astype(jnp.int32), conv_w, a_t,
                          X.astype(jnp.float32), params["weight"],
                          num_layers=num_layers, num_channels=n_chan,
                          w_out=w_out)                            # (C, |T|, w_out)

    # Channel-concatenated target-row features (T, C*w_out).
    x_sel = jnp.transpose(sel, (1, 0, 2)).reshape(n_tgt, n_chan * w_out)

    # Classifier head on |target_x| rows only (linear1/relu are row-wise, so
    # gathering first is exactly equivalent to the reference).  The matmuls are
    # (T,16)@(16,8)@(8,3) -- far below MXU/vreg tiles, so plain XLA handles
    # them better than a dedicated pallas_call would.
    h1 = jax.nn.relu(x_sel @ params["lin1_w_t"] + params["lin1_b"])
    y = h1 @ params["lin2_w_t"] + params["lin2_b"]
    return y, Ws


# ----------------------------------------------------------------------------
# Pure-JAX f32 reference (direct transcription of the PyTorch forward)
# ----------------------------------------------------------------------------

def _norm_ref(h, add):
    n = h.shape[0]
    eye = jnp.eye(n, dtype=jnp.float32)
    hm = h * (1.0 - eye) + (eye if add else 0.0)
    deg = jnp.sum(hm, axis=0)                       # column sums
    inv = jnp.where(deg == 0.0, 0.0, 1.0 / deg)
    return hm * inv[None, :]


def gtn_forward_ref(params, A, X, target_x):
    n_chan = params["num_channels"]
    num_layers = params["num_layers"]
    a_perm = jnp.transpose(A, (2, 0, 1)).astype(jnp.float32)     # (E, N, N)

    def conv(sm_row):
        return jnp.tensordot(sm_row, a_perm, axes=([0], [0]))    # (N, N)

    xw = X.astype(jnp.float32) @ params["weight"]
    feats = []
    for ch in range(n_chan):
        sm1 = jax.nn.softmax(params["layers"][0]["w1"], axis=1)[ch]
        sm2 = jax.nn.softmax(params["layers"][0]["w2"], axis=1)[ch]
        h = conv(sm1) @ conv(sm2)
        for i in range(1, num_layers):
            smi = jax.nn.softmax(params["layers"][i]["w1"], axis=1)[ch]
            h = _norm_ref(h, False) @ conv(smi)
        feats.append(jax.nn.relu(_norm_ref(h, True).T @ xw))
    x_cat = jnp.concatenate(feats, axis=1)
    h1 = jax.nn.relu(x_cat @ params["lin1_w_t"] + params["lin1_b"])
    y_full = h1 @ params["lin2_w_t"] + params["lin2_b"]
    return y_full[target_x]


# ----------------------------------------------------------------------------
# Demo
# ----------------------------------------------------------------------------

if __name__ == "__main__":
    N = 16          # nodes
    E = 4           # edge types
    C = 2           # channels
    W_IN = 8
    W_OUT = 8
    NUM_CLASS = 3
    NUM_LAYERS = 2

    key = jax.random.PRNGKey(0)
    k_a, k_x, k_p = jax.random.split(key, 3)

    # Sparse-ish 0/1 adjacency stack (N, N, E) and node features (N, w_in).
    A = (jax.random.uniform(k_a, (N, N, E)) < 0.3).astype(jnp.float32)
    X = jax.random.normal(k_x, (N, W_IN), jnp.float32)
    target_x = jnp.array([0, 3, 5, 7], dtype=jnp.int32)

    params = init_gtn_params(k_p, E, C, W_IN, W_OUT, NUM_CLASS, NUM_LAYERS)

    y, Ws = gtn_forward(params, A, X, target_x)
    y = jax.block_until_ready(y)

    # Validate against a pure-JAX f32 transcription of the PyTorch forward.
    # (The only intentional numeric delta is the bf16 MXU-operand cast on the
    #  (N,N) meta-path products and the GCN matmul; accumulation stays f32.)
    y_ref = jax.block_until_ready(gtn_forward_ref(params, A, X, target_x))
    err = float(jnp.max(jnp.abs(y - y_ref)))
    scale = float(jnp.max(jnp.abs(y_ref))) + 1e-6

    assert y.shape == (target_x.shape[0], NUM_CLASS)
    assert len(Ws) == NUM_LAYERS and len(Ws[0]) == 2 and len(Ws[1]) == 1
    assert bool(jnp.all(jnp.isfinite(y)))
    assert err <= 1e-2 + 3e-2 * scale, f"mismatch vs reference: {err} (scale {scale})"
    print("KERNEL_OK")
</pallas_src>

<mosaic_0001>
module attributes {stable_mosaic.version = 11 : i64} {
  func.func @_gtn_core_kernel(%arg0: i32, %arg1: memref<4xi32, #tpu.memory_space<smem>>, %arg2: memref<6x4xf32, #tpu.memory_space<smem>>, %arg3: memref<4x16x16xbf16, #tpu.memory_space<vmem>>, %arg4: memref<16x8xf32, #tpu.memory_space<vmem>>, %arg5: memref<8x8xf32, #tpu.memory_space<vmem>>, %arg6: memref<1x4x8xf32, #tpu.memory_space<vmem>>, %arg7: memref<16x8xf32, #tpu.memory_space<vmem>>) attributes {dimension_semantics = [#tpu.dimension_semantics<parallel>], iteration_bounds = array<i64: 2>, scalar_prefetch = 2 : i64, scratch_operands = 1 : i64, tpu.core_type = #tpu.core_type<tc>, window_params = [{pipeline_mode = #tpu.pipeline_mode<synchronous>, transform_indices = @transform_0, window_bounds = array<i64: 4, 16, 16>}, {pipeline_mode = #tpu.pipeline_mode<synchronous>, transform_indices = @transform_1, window_bounds = array<i64: 16, 8>}, {pipeline_mode = #tpu.pipeline_mode<synchronous>, transform_indices = @transform_2, window_bounds = array<i64: 8, 8>}, {transform_indices = @transform_3, window_bounds = array<i64: 1, 4, 8>}]} {
    %c0 = arith.constant 0 : index
    %c0_0 = arith.constant 0 : index
    %0 = vector.load %arg4[%c0, %c0_0] : memref<16x8xf32, #tpu.memory_space<vmem>>, vector<16x8xf32>
    %c0_1 = arith.constant 0 : index
    %c0_2 = arith.constant 0 : index
    %1 = vector.load %arg5[%c0_1, %c0_2] : memref<8x8xf32, #tpu.memory_space<vmem>>, vector<8x8xf32>
    %cst = arith.constant dense<0.000000e+00> : vector<16x8xf32>
    %2 = tpu.matmul %0, %1, %cst {dimension_numbers = #tpu.dot_dimension_numbers<[1], [0], [0], [1], [0, 0, 1, 1], [], []>} : vector<16x8xf32>, vector<8x8xf32>, vector<16x8xf32> -> vector<16x8xf32>
    %3 = arith.truncf %2 : vector<16x8xf32> to vector<16x8xbf16>
    %4 = tpu.iota {dimensions = array<i32: 0>} : vector<16x16xi32>
    %5 = tpu.iota {dimensions = array<i32: 1>} : vector<16x16xi32>
    %6 = arith.cmpi eq, %4, %5 : vector<16x16xi32>
    %c2_i32 = arith.constant 2 : i32
    %7 = arith.addi %c2_i32, %arg0 : i32
    %8 = arith.index_cast %7 : i32 to index
    %c0_3 = arith.constant 0 : index
    %9 = memref.load %arg2[%8, %c0_3] : memref<6x4xf32, #tpu.memory_space<smem>>
    %c0_4 = arith.constant 0 : index
    %c0_5 = arith.constant 0 : index
    %c0_6 = arith.constant 0 : index
    %10 = vector.load %arg3[%c0_4, %c0_5, %c0_6] : memref<4x16x16xbf16, #tpu.memory_space<vmem>>, vector<1x16x16xbf16>
    %11 = vector.shape_cast %10 : vector<1x16x16xbf16> to vector<16x16xbf16>
    %12 = arith.extf %11 : vector<16x16xbf16> to vector<16x16xf32>
    %13 = vector.broadcast %9 : f32 to vector<16x16xf32>
    %14 = arith.mulf %13, %12 : vector<16x16xf32>
    %c2_i32_7 = arith.constant 2 : i32
    %15 = arith.addi %c2_i32_7, %arg0 : i32
    %16 = arith.index_cast %15 : i32 to index
    %c1 = arith.constant 1 : index
    %17 = memref.load %arg2[%16, %c1] : memref<6x4xf32, #tpu.memory_space<smem>>
    %c1_8 = arith.constant 1 : index
    %c0_9 = arith.constant 0 : index
    %c0_10 = arith.constant 0 : index
    %18 = vector.load %arg3[%c1_8, %c0_9, %c0_10] : memref<4x16x16xbf16, #tpu.memory_space<vmem>>, vector<1x16x16xbf16>
    %19 = vector.shape_cast %18 : vector<1x16x16xbf16> to vector<16x16xbf16>
    %20 = arith.extf %19 : vector<16x16xbf16> to vector<16x16xf32>
    %21 = vector.broadcast %17 : f32 to vector<16x16xf32>
    %22 = arith.mulf %21, %20 : vector<16x16xf32>
    %23 = arith.addf %14, %22 : vector<16x16xf32>
    %c2_i32_11 = arith.constant 2 : i32
    %24 = arith.addi %c2_i32_11, %arg0 : i32
    %25 = arith.index_cast %24 : i32 to index
    %c2 = arith.constant 2 : index
    %26 = memref.load %arg2[%25, %c2] : memref<6x4xf32, #tpu.memory_space<smem>>
    %c2_12 = arith.constant 2 : index
    %c0_13 = arith.constant 0 : index
    %c0_14 = arith.constant 0 : index
    %27 = vector.load %arg3[%c2_12, %c0_13, %c0_14] : memref<4x16x16xbf16, #tpu.memory_space<vmem>>, vector<1x16x16xbf16>
    %28 = vector.shape_cast %27 : vector<1x16x16xbf16> to vector<16x16xbf16>
    %29 = arith.extf %28 : vector<16x16xbf16> to vector<16x16xf32>
    %30 = vector.broadcast %26 : f32 to vector<16x16xf32>
    %31 = arith.mulf %30, %29 : vector<16x16xf32>
    %32 = arith.addf %23, %31 : vector<16x16xf32>
    %c2_i32_15 = arith.constant 2 : i32
    %33 = arith.addi %c2_i32_15, %arg0 : i32
    %34 = arith.index_cast %33 : i32 to index
    %c3 = arith.constant 3 : index
    %35 = memref.load %arg2[%34, %c3] : memref<6x4xf32, #tpu.memory_space<smem>>
    %c3_16 = arith.constant 3 : index
    %c0_17 = arith.constant 0 : index
    %c0_18 = arith.constant 0 : index
    %36 = vector.load %arg3[%c3_16, %c0_17, %c0_18] : memref<4x16x16xbf16, #tpu.memory_space<vmem>>, vector<1x16x16xbf16>
    %37 = vector.shape_cast %36 : vector<1x16x16xbf16> to vector<16x16xbf16>
    %38 = arith.extf %37 : vector<16x16xbf16> to vector<16x16xf32>
    %39 = vector.broadcast %35 : f32 to vector<16x16xf32>
    %40 = arith.mulf %39, %38 : vector<16x16xf32>
    %41 = arith.addf %32, %40 : vector<16x16xf32>
    %42 = arith.truncf %41 : vector<16x16xf32> to vector<16x16xbf16>
    %c0_i32 = arith.constant 0 : i32
    %43 = arith.addi %c0_i32, %arg0 : i32
    %44 = arith.index_cast %43 : i32 to index
    %c0_19 = arith.constant 0 : index
    %45 = memref.load %arg2[%44, %c0_19] : memref<6x4xf32, #tpu.memory_space<smem>>
    %c0_20 = arith.constant 0 : index
    %c0_21 = arith.constant 0 : index
    %c0_22 = arith.constant 0 : index
    %46 = vector.load %arg3[%c0_20, %c0_21, %c0_22] : memref<4x16x16xbf16, #tpu.memory_space<vmem>>, vector<1x16x16xbf16>
    %47 = vector.shape_cast %46 : vector<1x16x16xbf16> to vector<16x16xbf16>
    %48 = arith.extf %47 : vector<16x16xbf16> to vector<16x16xf32>
    %49 = vector.broadcast %45 : f32 to vector<16x16xf32>
    %50 = arith.mulf %49, %48 : vector<16x16xf32>
    %c0_i32_23 = arith.constant 0 : i32
    %51 = arith.addi %c0_i32_23, %arg0 : i32
    %52 = arith.index_cast %51 : i32 to index
    %c1_24 = arith.constant 1 : index
    %53 = memref.load %arg2[%52, %c1_24] : memref<6x4xf32, #tpu.memory_space<smem>>
    %c1_25 = arith.constant 1 : index
    %c0_26 = arith.constant 0 : index
    %c0_27 = arith.constant 0 : index
    %54 = vector.load %arg3[%c1_25, %c0_26, %c0_27] : memref<4x16x16xbf16, #tpu.memory_space<vmem>>, vector<1x16x16xbf16>
    %55 = vector.shape_cast %54 : vector<1x16x16xbf16> to vector<16x16xbf16>
    %56 = arith.extf %55 : vector<16x16xbf16> to vector<16x16xf32>
    %57 = vector.broadcast %53 : f32 to vector<16x16xf32>
    %58 = arith.mulf %57, %56 : vector<16x16xf32>
    %59 = arith.addf %50, %58 : vector<16x16xf32>
    %c0_i32_28 = arith.constant 0 : i32
    %60 = arith.addi %c0_i32_28, %arg0 : i32
    %61 = arith.index_cast %60 : i32 to index
    %c2_29 = arith.constant 2 : index
    %62 = memref.load %arg2[%61, %c2_29] : memref<6x4xf32, #tpu.memory_space<smem>>
    %c2_30 = arith.constant 2 : index
    %c0_31 = arith.constant 0 : index
    %c0_32 = arith.constant 0 : index
    %63 = vector.load %arg3[%c2_30, %c0_31, %c0_32] : memref<4x16x16xbf16, #tpu.memory_space<vmem>>, vector<1x16x16xbf16>
    %64 = vector.shape_cast %63 : vector<1x16x16xbf16> to vector<16x16xbf16>
    %65 = arith.extf %64 : vector<16x16xbf16> to vector<16x16xf32>
    %66 = vector.broadcast %62 : f32 to vector<16x16xf32>
    %67 = arith.mulf %66, %65 : vector<16x16xf32>
    %68 = arith.addf %59, %67 : vector<16x16xf32>
    %c0_i32_33 = arith.constant 0 : i32
    %69 = arith.addi %c0_i32_33, %arg0 : i32
    %70 = arith.index_cast %69 : i32 to index
    %c3_34 = arith.constant 3 : index
    %71 = memref.load %arg2[%70, %c3_34] : memref<6x4xf32, #tpu.memory_space<smem>>
    %c3_35 = arith.constant 3 : index
    %c0_36 = arith.constant 0 : index
    %c0_37 = arith.constant 0 : index
    %72 = vector.load %arg3[%c3_35, %c0_36, %c0_37] : memref<4x16x16xbf16, #tpu.memory_space<vmem>>, vector<1x16x16xbf16>
    %73 = vector.shape_cast %72 : vector<1x16x16xbf16> to vector<16x16xbf16>
    %74 = arith.extf %73 : vector<16x16xbf16> to vector<16x16xf32>
    %75 = vector.broadcast %71 : f32 to vector<16x16xf32>
    %76 = arith.mulf %75, %74 : vector<16x16xf32>
    %77 = arith.addf %68, %76 : vector<16x16xf32>
    %78 = arith.truncf %77 : vector<16x16xf32> to vector<16x16xbf16>
    %cst_38 = arith.constant dense<0.000000e+00> : vector<16x16xf32>
    %79 = tpu.matmul %42, %78, %cst_38 {dimension_numbers = #tpu.dot_dimension_numbers<[1], [0], [0], [1], [0, 0, 1, 1], [], []>} : vector<16x16xbf16>, vector<16x16xbf16>, vector<16x16xf32> -> vector<16x16xf32>
    %c4_i32 = arith.constant 4 : i32
    %80 = arith.addi %c4_i32, %arg0 : i32
    %81 = arith.index_cast %80 : i32 to index
    %c0_39 = arith.constant 0 : index
    %82 = memref.load %arg2[%81, %c0_39] : memref<6x4xf32, #tpu.memory_space<smem>>
    %c0_40 = arith.constant 0 : index
    %c0_41 = arith.constant 0 : index
    %c0_42 = arith.constant 0 : index
    %83 = vector.load %arg3[%c0_40, %c0_41, %c0_42] : memref<4x16x16xbf16, #tpu.memory_space<vmem>>, vector<1x16x16xbf16>
    %84 = vector.shape_cast %83 : vector<1x16x16xbf16> to vector<16x16xbf16>
    %85 = arith.extf %84 : vector<16x16xbf16> to vector<16x16xf32>
    %86 = vector.broadcast %82 : f32 to vector<16x16xf32>
    %87 = arith.mulf %86, %85 : vector<16x16xf32>
    %c4_i32_43 = arith.constant 4 : i32
    %88 = arith.addi %c4_i32_43, %arg0 : i32
    %89 = arith.index_cast %88 : i32 to index
    %c1_44 = arith.constant 1 : index
    %90 = memref.load %arg2[%89, %c1_44] : memref<6x4xf32, #tpu.memory_space<smem>>
    %c1_45 = arith.constant 1 : index
    %c0_46 = arith.constant 0 : index
    %c0_47 = arith.constant 0 : index
    %91 = vector.load %arg3[%c1_45, %c0_46, %c0_47] : memref<4x16x16xbf16, #tpu.memory_space<vmem>>, vector<1x16x16xbf16>
    %92 = vector.shape_cast %91 : vector<1x16x16xbf16> to vector<16x16xbf16>
    %93 = arith.extf %92 : vector<16x16xbf16> to vector<16x16xf32>
    %94 = vector.broadcast %90 : f32 to vector<16x16xf32>
    %95 = arith.mulf %94, %93 : vector<16x16xf32>
    %96 = arith.addf %87, %95 : vector<16x16xf32>
    %c4_i32_48 = arith.constant 4 : i32
    %97 = arith.addi %c4_i32_48, %arg0 : i32
    %98 = arith.index_cast %97 : i32 to index
    %c2_49 = arith.constant 2 : index
    %99 = memref.load %arg2[%98, %c2_49] : memref<6x4xf32, #tpu.memory_space<smem>>
    %c2_50 = arith.constant 2 : index
    %c0_51 = arith.constant 0 : index
    %c0_52 = arith.constant 0 : index
    %100 = vector.load %arg3[%c2_50, %c0_51, %c0_52] : memref<4x16x16xbf16, #tpu.memory_space<vmem>>, vector<1x16x16xbf16>
    %101 = vector.shape_cast %100 : vector<1x16x16xbf16> to vector<16x16xbf16>
    %102 = arith.extf %101 : vector<16x16xbf16> to vector<16x16xf32>
    %103 = vector.broadcast %99 : f32 to vector<16x16xf32>
    %104 = arith.mulf %103, %102 : vector<16x16xf32>
    %105 = arith.addf %96, %104 : vector<16x16xf32>
    %c4_i32_53 = arith.constant 4 : i32
    %106 = arith.addi %c4_i32_53, %arg0 : i32
    %107 = arith.index_cast %106 : i32 to index
    %c3_54 = arith.constant 3 : index
    %108 = memref.load %arg2[%107, %c3_54] : memref<6x4xf32, #tpu.memory_space<smem>>
    %c3_55 = arith.constant 3 : index
    %c0_56 = arith.constant 0 : index
    %c0_57 = arith.constant 0 : index
    %109 = vector.load %arg3[%c3_55, %c0_56, %c0_57] : memref<4x16x16xbf16, #tpu.memory_space<vmem>>, vector<1x16x16xbf16>
    %110 = vector.shape_cast %109 : vector<1x16x16xbf16> to vector<16x16xbf16>
    %111 = arith.extf %110 : vector<16x16xbf16> to vector<16x16xf32>
    %112 = vector.broadcast %108 : f32 to vector<16x16xf32>
    %113 = arith.mulf %112, %111 : vector<16x16xf32>
    %114 = arith.addf %105, %113 : vector<16x16xf32>
    %115 = arith.truncf %114 : vector<16x16xf32> to vector<16x16xbf16>
    %cst_58 = arith.constant 0.000000e+00 : f32
    %116 = vector.broadcast %cst_58 : f32 to vector<16x16xf32>
    %117 = arith.select %6, %116, %79 : vector<16x16xi1>, vector<16x16xf32>
    %cst_59 = arith.constant dense<0.000000e+00> : vector<16xf32>
    %118 = vector.multi_reduction <add>, %117, %cst_59 [1] : vector<16x16xf32> to vector<16xf32>
    %119 = vector.shape_cast %118 : vector<16xf32> to vector<16x1xf32>
    %cst_60 = arith.constant 0.000000e+00 : f32
    %120 = vector.broadcast %cst_60 : f32 to vector<16x1xf32>
    %121 = arith.cmpf oeq, %119, %120 : vector<16x1xf32>
    %cst_61 = arith.constant 1.000000e+00 : f32
    %122 = vector.broadcast %cst_61 : f32 to vector<16x1xf32>
    %123 = arith.select %121, %122, %119 : vector<16x1xi1>, vector<16x1xf32>
    %cst_62 = arith.constant 1.000000e+00 : f32
    %124 = vector.broadcast %cst_62 : f32 to vector<16x1xf32>
    %125 = arith.divf %124, %123 : vector<16x1xf32>
    %cst_63 = arith.constant 0.000000e+00 : f32
    %126 = vector.broadcast %cst_63 : f32 to vector<16x1xf32>
    %127 = arith.cmpf oeq, %119, %126 : vector<16x1xf32>
    %cst_64 = arith.constant 0.000000e+00 : f32
    %128 = vector.broadcast %cst_64 : f32 to vector<16x1xf32>
    %129 = arith.select %127, %128, %125 : vector<16x1xi1>, vector<16x1xf32>
    %130 = vector.broadcast %129 : vector<16x1xf32> to vector<16x16xf32>
    %131 = arith.mulf %117, %130 : vector<16x16xf32>
    %132 = arith.truncf %131 : vector<16x16xf32> to vector<16x16xbf16>
    %cst_65 = arith.constant dense<0.000000e+00> : vector<16x16xf32>
    %133 = tpu.matmul %115, %132, %cst_65 {dimension_numbers = #tpu.dot_dimension_numbers<[1], [0], [0], [1], [0, 0, 1, 1], [], []>} : vector<16x16xbf16>, vector<16x16xbf16>, vector<16x16xf32> -> vector<16x16xf32>
    %cst_66 = arith.constant 1.000000e+00 : f32
    %134 = vector.broadcast %cst_66 : f32 to vector<16x16xf32>
    %135 = arith.select %6, %134, %133 : vector<16x16xi1>, vector<16x16xf32>
    %cst_67 = arith.constant dense<0.000000e+00> : vector<16xf32>
    %136 = vector.multi_reduction <add>, %135, %cst_67 [1] : vector<16x16xf32> to vector<16xf32>
    %137 = vector.shape_cast %136 : vector<16xf32> to vector<16x1xf32>
    %cst_68 = arith.constant 0.000000e+00 : f32
    %138 = vector.broadcast %cst_68 : f32 to vector<16x1xf32>
    %139 = arith.cmpf oeq, %137, %138 : vector<16x1xf32>
    %cst_69 = arith.constant 1.000000e+00 : f32
    %140 = vector.broadcast %cst_69 : f32 to vector<16x1xf32>
    %141 = arith.select %139, %140, %137 : vector<16x1xi1>, vector<16x1xf32>
    %cst_70 = arith.constant 1.000000e+00 : f32
    %142 = vector.broadcast %cst_70 : f32 to vector<16x1xf32>
    %143 = arith.divf %142, %141 : vector<16x1xf32>
    %cst_71 = arith.constant 0.000000e+00 : f32
    %144 = vector.broadcast %cst_71 : f32 to vector<16x1xf32>
    %145 = arith.cmpf oeq, %137, %144 : vector<16x1xf32>
    %cst_72 = arith.constant 0.000000e+00 : f32
    %146 = vector.broadcast %cst_72 : f32 to vector<16x1xf32>
    %147 = arith.select %145, %146, %143 : vector<16x1xi1>, vector<16x1xf32>
    %148 = vector.broadcast %147 : vector<16x1xf32> to vector<16x16xf32>
    %149 = arith.mulf %135, %148 : vector<16x16xf32>
    %150 = arith.truncf %149 : vector<16x16xf32> to vector<16x16xbf16>
    %cst_73 = arith.constant dense<0.000000e+00> : vector<16x8xf32>
    %151 = tpu.matmul %150, %3, %cst_73 {dimension_numbers = #tpu.dot_dimension_numbers<[1], [0], [0], [1], [0, 0, 1, 1], [], []>} : vector<16x16xbf16>, vector<16x8xbf16>, vector<16x8xf32> -> vector<16x8xf32>
    %cst_74 = arith.constant 0.000000e+00 : f32
    %152 = vector.broadcast %cst_74 : f32 to vector<16x8xf32>
    %153 = arith.maximumf %151, %152 : vector<16x8xf32>
    %c0_75 = arith.constant 0 : index
    %c0_76 = arith.constant 0 : index
    %154 = vector.load %arg7[%c0_75, %c0_76] : memref<16x8xf32, #tpu.memory_space<vmem>>, vector<16x8xf32>
    tpu.vector_store %arg7[%c0_75, %c0_76], %153 {strides = array<i32>} : memref<16x8xf32, #tpu.memory_space<vmem>>, vector<16x8xf32>,
    %c0_77 = arith.constant 0 : index
    %155 = memref.load %arg1[%c0_77] : memref<4xi32, #tpu.memory_space<smem>>
    %156 = arith.index_cast %155 : i32 to index
    %c0_78 = arith.constant 0 : index
    %157 = vector.load %arg7[%156, %c0_78] : memref<16x8xf32, #tpu.memory_space<vmem>>, vector<1x8xf32>
    %c0_79 = arith.constant 0 : index
    %c0_80 = arith.constant 0 : index
    %c0_81 = arith.constant 0 : index
    %158 = vector.load %arg6[%c0_79, %c0_80, %c0_81] : memref<1x4x8xf32, #tpu.memory_space<vmem>>, vector<1x1x8xf32>
    %159 = vector.shape_cast %158 : vector<1x1x8xf32> to vector<1x8xf32>
    %160 = vector.shape_cast %157 : vector<1x8xf32> to vector<1x1x8xf32>
    tpu.vector_store %arg6[%c0_79, %c0_80, %c0_81], %160 {strides = array<i32>} : memref<1x4x8xf32, #tpu.memory_space<vmem>>, vector<1x1x8xf32>,
    %c1_82 = arith.constant 1 : index
    %161 = memref.load %arg1[%c1_82] : memref<4xi32, #tpu.memory_space<smem>>
    %162 = arith.index_cast %161 : i32 to index
    %c0_83 = arith.constant 0 : index
    %163 = vector.load %arg7[%162, %c0_83] : memref<16x8xf32, #tpu.memory_space<vmem>>, vector<1x8xf32>
    %c0_84 = arith.constant 0 : index
    %c1_85 = arith.constant 1 : index
    %c0_86 = arith.constant 0 : index
    %164 = vector.load %arg6[%c0_84, %c1_85, %c0_86] : memref<1x4x8xf32, #tpu.memory_space<vmem>>, vector<1x1x8xf32>
    %165 = vector.shape_cast %164 : vector<1x1x8xf32> to vector<1x8xf32>
    %166 = vector.shape_cast %163 : vector<1x8xf32> to vector<1x1x8xf32>
    tpu.vector_store %arg6[%c0_84, %c1_85, %c0_86], %166 {strides = array<i32>} : memref<1x4x8xf32, #tpu.memory_space<vmem>>, vector<1x1x8xf32>,
    %c2_87 = arith.constant 2 : index
    %167 = memref.load %arg1[%c2_87] : memref<4xi32, #tpu.memory_space<smem>>
    %168 = arith.index_cast %167 : i32 to index
    %c0_88 = arith.constant 0 : index
    %169 = vector.load %arg7[%168, %c0_88] : memref<16x8xf32, #tpu.memory_space<vmem>>, vector<1x8xf32>
    %c0_89 = arith.constant 0 : index
    %c2_90 = arith.constant 2 : index
    %c0_91 = arith.constant 0 : index
    %170 = vector.load %arg6[%c0_89, %c2_90, %c0_91] : memref<1x4x8xf32, #tpu.memory_space<vmem>>, vector<1x1x8xf32>
    %171 = vector.shape_cast %170 : vector<1x1x8xf32> to vector<1x8xf32>
    %172 = vector.shape_cast %169 : vector<1x8xf32> to vector<1x1x8xf32>
    tpu.vector_store %arg6[%c0_89, %c2_90, %c0_91], %172 {strides = array<i32>} : memref<1x4x8xf32, #tpu.memory_space<vmem>>, vector<1x1x8xf32>,
    %c3_92 = arith.constant 3 : index
    %173 = memref.load %arg1[%c3_92] : memref<4xi32, #tpu.memory_space<smem>>
    %174 = arith.index_cast %173 : i32 to index
    %c0_93 = arith.constant 0 : index
    %175 = vector.load %arg7[%174, %c0_93] : memref<16x8xf32, #tpu.memory_space<vmem>>, vector<1x8xf32>
    %c0_94 = arith.constant 0 : index
    %c3_95 = arith.constant 3 : index
    %c0_96 = arith.constant 0 : index
    %176 = vector.load %arg6[%c0_94, %c3_95, %c0_96] : memref<1x4x8xf32, #tpu.memory_space<vmem>>, vector<1x1x8xf32>
    %177 = vector.shape_cast %176 : vector<1x1x8xf32> to vector<1x8xf32>
    %178 = vector.shape_cast %175 : vector<1x8xf32> to vector<1x1x8xf32>
    tpu.vector_store %arg6[%c0_94, %c3_95, %c0_96], %178 {strides = array<i32>} : memref<1x4x8xf32, #tpu.memory_space<vmem>>, vector<1x1x8xf32>,
    return
  }
  func.func @transform_0(%arg0: i32, %arg1: memref<4xi32, #tpu.memory_space<smem>>, %arg2: memref<6x4xf32, #tpu.memory_space<smem>>) -> (i32, i32, i32) {
    %c0_i32 = arith.constant 0 : i32
    %c0_i32_0 = arith.constant 0 : i32
    %c0_i32_1 = arith.constant 0 : i32
    %c0_i32_2 = arith.constant 0 : i32
    return %c0_i32, %c0_i32_0, %c0_i32_1 : i32, i32, i32
  }
  func.func @transform_1(%arg0: i32, %arg1: memref<4xi32, #tpu.memory_space<smem>>, %arg2: memref<6x4xf32, #tpu.memory_space<smem>>) -> (i32, i32) {
    %c0_i32 = arith.constant 0 : i32
    %c0_i32_0 = arith.constant 0 : i32
    %c0_i32_1 = arith.constant 0 : i32
    return %c0_i32, %c0_i32_0 : i32, i32
  }
  func.func @transform_2(%arg0: i32, %arg1: memref<4xi32, #tpu.memory_space<smem>>, %arg2: memref<6x4xf32, #tpu.memory_space<smem>>) -> (i32, i32) {
    %c0_i32 = arith.constant 0 : i32
    %c0_i32_0 = arith.constant 0 : i32
    %c0_i32_1 = arith.constant 0 : i32
    return %c0_i32, %c0_i32_0 : i32, i32
  }
  func.func @transform_3(%arg0: i32, %arg1: memref<4xi32, #tpu.memory_space<smem>>, %arg2: memref<6x4xf32, #tpu.memory_space<smem>>) -> (i32, i32, i32) {
    %c0_i32 = arith.constant 0 : i32
    %c0_i32_0 = arith.constant 0 : i32
    %c0_i32_1 = arith.constant 0 : i32
    return %arg0, %c0_i32, %c0_i32_0 : i32, i32, i32
  }
}

</mosaic_0001>

<llo_original>
// kernel: tpu_custom_call.1
$region0: #{tpu_custom_call.1}
  #allocation0 [shape = 'u32[]', space=smem, size = 0x4, offset = 0x4, fixed_abs, tag = 'smem constant byte address 0x4 - core index']
  #allocation1 [shape = 'u32[144,128]{1,0:T(1,128)}', space=vmem, size = 0x12000, scoped, tag = 'internal scratch']
  #allocation2 [shape = 'f32[16,8]{1,0:T(8,128)}', space=vmem, size = 0x2000, scoped, tag = 'scratch operand']
  #allocation3 [shape = 's32[1]{0}', space=sflag, size = 0x4, scoped, tag = 'scoped memory for tpu_custom_call.1']
  #allocation4 [shape = 'u8[512]{0}', space=smem, size = 0x200, scoped, tag = 'prefetched SMEM operand 0']
  #allocation5 [shape = 'u8[4096]{0}', space=smem, size = 0x1000, scoped, tag = 'prefetched SMEM operand 1']
  %s0 = inlined_call_operand.vmem [shape: s32[4], index: 0, kind: input, shape index: {}]
  %s1 = inlined_call_operand.vmem [shape: f32[6,4], index: 1, kind: input, shape index: {}]
  %s2 = inlined_call_operand.vmem [shape: bf16[4,16,16], index: 2, kind: input, shape index: {}]
  %s3 = inlined_call_operand.vmem [shape: f32[16,8], index: 3, kind: input, shape index: {}]
  %s4 = inlined_call_operand.vmem [shape: f32[8,8], index: 4, kind: input, shape index: {}]
  %s5 = inlined_call_operand.hbm [shape: f32[2,4,8], index: 5, kind: output, shape index: {}]
  %s6 = sld [smem:[#allocation0]]
  $region45: #{tpu_custom_call.1} parent=0
    _
  %s8 = ssub.s32 1, %s6
  %s9 = scalar_select 0, %s8, %s6
  %s10 = sshll.u32 %s0, 4
  %s11 = int_to_ptr.vmem [resolvable:$true] %s10
  %13 = dma.vmem_to_smem %s11, 16, [#allocation4], [#allocation3]
  %s14 = sshll.u32 %s1, 4
  %s15 = int_to_ptr.vmem [resolvable:$true] %s14
  %17 = dma.vmem_to_smem %s15, 128, [#allocation5], [#allocation3]
  %18 = dma.done [#allocation3], 144
  %19 = sfence
  $region1: #{tpu_custom_call.1} parent=0
    #allocation6 [shape = 'u8[4096]{0}', space=vmem, size = 0x1000, scoped, tag = 'output window, operand 0']
    #allocation7 [shape = 's32[2]{0}', space=sflag, size = 0x8, scoped, tag = 'scoped memory for tpu_custom_call.1']
    %20 = vsyncpa [#allocation7], 0
    %s21 = scalar_lea.sflag [#allocation7], 1
    %22 = vsyncpa %s21, 0
    loop: start=0, step=1, limit=4
    $region2: #{tpu_custom_call.1} parent=1 // loop_pre_header
      _
    $region3: #{tpu_custom_call.1} parent=1 // loop_header
      %s24 = sphi 0, %s28
      %p25 = scmp.ge.s32.totalorder %s24, 4
      %s32 = sphi 0, %s32
      %s34 = sphi 0, %s32
      %s35 = sphi 0, %s34
      %s49 = sphi 0, %s35
      %s53 = sphi 0, %s53
      %s55 = sphi 0, %s53
      %s56 = sphi 0, %s55
      %s70 = sphi 0, %s56
      %s74 = sphi 0, %s74
      %s76 = sphi 0, %s74
      %s77 = sphi 0, %s76
      %s91 = sphi 0, %s77
      %s97 = sphi 0, %s99
      %s100 = sphi 0, %s97
      %s101 = sphi 0, %s100
      %s117 = sphi 0, %s101
    $region4: #{tpu_custom_call.1} parent=1 // loop_header_branch
      %27 = sbr.rel (%p25) target = $region8
    $region5: #{tpu_custom_call.1} parent=1 // loop_body
      %s29 = ssub.s32 %s24, 1
      %s30 = ssub.s32 %s24, 2
      %s31 = sadd.s32 %s24, 1
      %s33 = sadd.s32 %s32, 1
      %p36 = scmp.eq.s32.totalorder %s24, 1
      %p37 = scmp.ne.s32.totalorder %s32, %s34
      %p38 = scmp.eq.s32.totalorder %s24, 0
      %p39 = por %p37, %p38
      %p40 = scmp.ne.s32.totalorder %s32, %s34
      %p41 = scmp.eq.s32.totalorder %s29, 1
      %p42 = por %p40, %p41
      %p43 = scmp.ne.s32.totalorder %s34, %s35
      %p44 = scmp.eq.s32.totalorder %s29, 0
      %p45 = por %p43, %p44
      %p46 = scmp.ne.s32.totalorder %s34, %s35
      %p47 = scmp.eq.s32.totalorder %s30, 1
      %p48 = por %p46, %p47
      %p50 = scmp.ne.s32.totalorder %s35, %s49
      %p51 = scmp.eq.s32.totalorder %s30, 0
      %p52 = por %p50, %p51
      %s54 = sadd.s32 %s53, 1
      %p57 = scmp.eq.s32.totalorder %s24, 1
      %p58 = scmp.ne.s32.totalorder %s53, %s55
      %p59 = scmp.eq.s32.totalorder %s24, 0
      %p60 = por %p58, %p59
      %p61 = scmp.ne.s32.totalorder %s53, %s55
      %p62 = scmp.eq.s32.totalorder %s29, 1
      %p63 = por %p61, %p62
      %p64 = scmp.ne.s32.totalorder %s55, %s56
      %p65 = scmp.eq.s32.totalorder %s29, 0
      %p66 = por %p64, %p65
      %p67 = scmp.ne.s32.totalorder %s55, %s56
      %p68 = scmp.eq.s32.totalorder %s30, 1
      %p69 = por %p67, %p68
      %p71 = scmp.ne.s32.totalorder %s56, %s70
      %p72 = scmp.eq.s32.totalorder %s30, 0
      %p73 = por %p71, %p72
      %s75 = sadd.s32 %s74, 1
      %p78 = scmp.eq.s32.totalorder %s24, 1
      %p79 = scmp.ne.s32.totalorder %s74, %s76
      %p80 = scmp.eq.s32.totalorder %s24, 0
      %p81 = por %p79, %p80
      %p82 = scmp.ne.s32.totalorder %s74, %s76
      %p83 = scmp.eq.s32.totalorder %s29, 1
      %p84 = por %p82, %p83
      %p85 = scmp.ne.s32.totalorder %s76, %s77
      %p86 = scmp.eq.s32.totalorder %s29, 0
      %p87 = por %p85, %p86
      %p88 = scmp.ne.s32.totalorder %s76, %s77
      %p89 = scmp.eq.s32.totalorder %s30, 1
      %p90 = por %p88, %p89
      %p92 = scmp.ne.s32.totalorder %s77, %s91
      %p93 = scmp.eq.s32.totalorder %s30, 0
      %p94 = por %p92, %p93
      %s95 = ssub.s32 %s24, %s31
      %p96 = scmp.eq.s32.totalorder %s95, 0
      %s98 = sadd.s32 %s97, 1
      %s99 = scalar_select %p96, %s97, %s98
      %p102 = pneg %p96
      %p103 = scmp.eq.s32.totalorder %s24, 1
      %p104 = por %p102, %p103
      %p105 = scmp.ne.s32.totalorder %s97, %s100
      %p106 = scmp.eq.s32.totalorder %s24, 0
      %p107 = por %p105, %p106
      %p108 = scmp.ne.s32.totalorder %s97, %s100
      %p109 = scmp.eq.s32.totalorder %s29, 1
      %p110 = por %p108, %p109
      %p111 = scmp.ne.s32.totalorder %s100, %s101
      %p112 = scmp.eq.s32.totalorder %s29, 0
      %p113 = por %p111, %p112
      %p114 = scmp.ne.s32.totalorder %s100, %s101
      %p115 = scmp.eq.s32.totalorder %s30, 1
      %p116 = por %p114, %p115
      %p118 = scmp.ne.s32.totalorder %s101, %s117
      %p119 = scmp.eq.s32.totalorder %s30, 0
      %p120 = por %p118, %p119
      %p121 = scmp.le.s32.totalorder 1, %s24
      %p122 = scmp.lt.s32.totalorder %s24, 3
      %p123 = pnand %p121, %p122
      %p124 = pneg %p123
      // Predicated region
      $region9: #{tpu_custom_call.1} parent=5 // pred_check
        _
      $region10: #{tpu_custom_call.1} parent=5 // pred_check_branch
        %126 = sbr.rel (%p123) target = $region12
      $region11: #{tpu_custom_call.1} parent=5 // pred_region
        %s127 = ssub.s32 %s24, 1
        // Predicated region
        $region13: #{tpu_custom_call.1} parent=11 // pred_check
          %p128 = pneg %p45
        $region14: #{tpu_custom_call.1} parent=11 // pred_check_branch
          %130 = sbr.rel (%p128) target = $region16
        $region15: #{tpu_custom_call.1} parent=11 // pred_region
          _
        $region16: #{tpu_custom_call.1} parent=11 // pred_fallthru
          _
        // Predicated region
        $region17: #{tpu_custom_call.1} parent=11 // pred_check
          %p131 = pneg %p66
        $region18: #{tpu_custom_call.1} parent=11 // pred_check_branch
          %133 = sbr.rel (%p131) target = $region20
        $region19: #{tpu_custom_call.1} parent=11 // pred_region
          _
        $region20: #{tpu_custom_call.1} parent=11 // pred_fallthru
          _
        // Predicated region
        $region21: #{tpu_custom_call.1} parent=11 // pred_check
          %p134 = pneg %p87
        $region22: #{tpu_custom_call.1} parent=11 // pred_check_branch
          %136 = sbr.rel (%p134) target = $region24
        $region23: #{tpu_custom_call.1} parent=11 // pred_region
          _
        $region24: #{tpu_custom_call.1} parent=11 // pred_fallthru
          _
      $region12: #{tpu_custom_call.1} parent=5 // pred_fallthru
        _
      %p137 = scmp.lt.s32.totalorder %s24, 2
      // Predicated region
      $region25: #{tpu_custom_call.1} parent=5 // pred_check
        %p138 = pneg %p137
      $region26: #{tpu_custom_call.1} parent=5 // pred_check_branch
        %140 = sbr.rel (%p138) target = $region28
      $region27: #{tpu_custom_call.1} parent=5 // pred_region
        _
      $region28: #{tpu_custom_call.1} parent=5 // pred_fallthru
        _
      %p141 = scmp.le.s32.totalorder 1, %s24
      %p142 = scmp.lt.s32.totalorder %s24, 3
      %p143 = pnand %p141, %p142
      %p144 = pneg %p143
      // Predicated region
      $region29: #{tpu_custom_call.1} parent=5 // pred_check
        _
      $region30: #{tpu_custom_call.1} parent=5 // pred_check_branch
        %146 = sbr.rel (%p143) target = $region32
      $region31: #{tpu_custom_call.1} parent=5 // pred_region
        %s147 = ssub.s32 %s24, 1
        %p148 = pneg %p45
        %p149 = pneg %p42
        %p150 = pneg %p66
        %p151 = pneg %p63
        %p152 = pneg %p87
        %p153 = pneg %p84
        %p154 = pneg %p113
        %p155 = pneg %p110
        %s156 = sand.u32 %s100, 1
        %s157 = scalar_lea.sflag [#allocation7], %s156
        %s158 = sand.u32 %s100, 1
        %s159 = smul.addr %s158, 4
        %s160 = scalar_lea.vmem [#allocation6], %s159
        %v162 = vld [vmem:[%s3] sm:$0xff]
        %v163 = vld [vmem:[%s3 + $0x8] sm:$0xff]
        %v164 = vld [vmem:[%s4] sm:$0xff]
        %vm165 = vcmask 64512
        %v167 = vsel %vm165, %v162, 0
        %v170 = vsel %vm165, %v163, 0
        %172 = vmatprep.subr.mxu0 0.0
        %173 = vmatpush1.msra.mxu0 0.0
        %174 = vmatprep.subr.mxu0 0.0
        %175 = vmatpush1.msra.mxu0 0.0
        %176 = vmatprep.subr.mxu0 0.0
        %177 = vmatpush1.msra.mxu0 0.0
        %178 = vmatprep.subr.mxu0 0.0
        %179 = vmatpush1.msra.mxu0 0.0
        %180 = vmatprep.subr.mxu0 0.0
        %181 = vmatpush1.msra.mxu0 0.0
        %182 = vmatprep.subr.mxu0 0.0
        %183 = vmatpush1.msra.mxu0 0.0
        %184 = vmatprep.subr.mxu0 0.0
        %185 = vmatpush1.msra.mxu0 0.0
        %186 = vmatprep.subr.mxu0 0.0
        %187 = vmatpush1.msra.mxu0 0.0
        %188 = vmatprep.subr.mxu0 0.0
        %189 = vmatpush1.msra.mxu0 0.0
        %190 = vmatprep.subr.mxu0 0.0
        %191 = vmatpush1.msra.mxu0 0.0
        %192 = vmatprep.subr.mxu0 0.0
        %193 = vmatpush1.msra.mxu0 0.0
        %194 = vmatprep.subr.mxu0 0.0
        %195 = vmatpush1.msra.mxu0 0.0
        %196 = vmatprep.subr.mxu0 0.0
        %197 = vmatpush1.msra.mxu0 0.0
        %198 = vmatprep.subr.mxu0 0.0
        %199 = vmatpush1.msra.mxu0 0.0
        %200 = vmatprep.subr.mxu0 0.0
        %201 = vmatpush1.msra.mxu0 0.0
        %202 = vmatprep.subr.mxu0 0.0
        %203 = vmatpush1.msra.mxu0 %v164
        %204 = vmatprep.subr.mxu0 0.0
        %205 = vmatpush2.msra.mxu0 0.0
        %206 = vmatprep.subr.mxu0 0.0
        %207 = vmatpush2.msra.mxu0 0.0
        %208 = vmatprep.subr.mxu0 0.0
        %209 = vmatpush2.msra.mxu0 0.0
        %210 = vmatprep.subr.mxu0 0.0
        %211 = vmatpush2.msra.mxu0 0.0
        %212 = vmatprep.subr.mxu0 0.0
        %213 = vmatpush2.msra.mxu0 0.0
        %214 = vmatprep.subr.mxu0 0.0
        %215 = vmatpush2.msra.mxu0 0.0
        %216 = vmatprep.subr.mxu0 0.0
        %217 = vmatpush2.msra.mxu0 0.0
        %218 = vmatprep.subr.mxu0 0.0
        %219 = vmatpush2.msra.mxu0 0.0
        %220 = vmatprep.subr.mxu0 0.0
        %221 = vmatpush2.msra.mxu0 0.0
        %222 = vmatprep.subr.mxu0 0.0
        %223 = vmatpush2.msra.mxu0 0.0
        %224 = vmatprep.subr.mxu0 0.0
        %225 = vmatpush2.msra.mxu0 0.0
        %226 = vmatprep.subr.mxu0 0.0
        %227 = vmatpush2.msra.mxu0 0.0
        %228 = vmatprep.subr.mxu0 0.0
        %229 = vmatpush2.msra.mxu0 0.0
        %230 = vmatprep.subr.mxu0 0.0
        %231 = vmatpush2.msra.mxu0 0.0
        %232 = vmatprep.subr.mxu0 0.0
        %233 = vmatpush2.msra.mxu0 0.0
        %234 = vmatprep.subr.mxu0 0.0
        %235 = vmatpush2.msra.mxu0 0.0
        %236 = vmatprep.mubr.f32.mxu0 0.0
        %237 = vmatmul.mubr.f32.gmra.mxu0 %v167
        %v238 = vpop.f32.mrf.mxu0
        %v239 = vadd.f32 0.0, %v238
        %v240 = vpop.f32.mrf.mxu0
        %241 = vmatprep.mubr.f32.mxu0 0.0
        %242 = vmatmul.mubr.f32.gmra.mxu0 %v170
        %v243 = vpop.f32.mrf.mxu0
        %v244 = vadd.f32 0.0, %v243
        %v245 = vpop.f32.mrf.mxu0
        %246 = vdwg.mxu0
        %v247 = vpack.c.bf16 %v244, %v239
        %v248 = vlaneseq
        %v249 = vshrl.u32 %v248, 7
        %v250 = vadd.s32 %v249, 8
        %v251 = vlaneseq
        %v252 = vand.u32 %v251, 127
        %vm253 = vcmp.eq.s32.totalorder %v249, %v252
        %vm254 = vcmp.eq.s32.totalorder %v250, %v252
        %s255 = sadd.s32 %s29, 2
        %s256 = smul.u32 %s255, 128
        %s257 = sld [smem:[#allocation5 + %s256]]
        %v258 = vld [vmem:[%s2] sm:$0xf]
        %v259 = vld [vmem:[%s2 + $0x4] sm:$0xf]
        %v260 = vunpack.c.l.bf16 %v258
        %v261 = vunpack.c.l.bf16 %v259
        %v262 = vstv %s257
        %v263 = vmul.f32 %v262, %v260
        %v264 = vmul.f32 %v262, %v261
        %s265 = sadd.s32 %s256, 1
        %s266 = sld [smem:[#allocation5 + %s265]]
        %s267 = scalar_lea.vmem %s2, 8
        %v268 = vld [vmem:[%s267] sm:$0xf]
        %v269 = vld [vmem:[%s267 + $0x4] sm:$0xf]
        %v270 = vunpack.c.l.bf16 %v268
        %v271 = vunpack.c.l.bf16 %v269
        %v272 = vstv %s266
        %v273 = vmul.f32 %v272, %v270
        %v274 = vmul.f32 %v272, %v271
        %v275 = vadd.f32 %v263, %v273
        %v276 = vadd.f32 %v264, %v274
        %s277 = sadd.s32 %s256, 2
        %s278 = sld [smem:[#allocation5 + %s277]]
        %s279 = scalar_lea.vmem %s2, 16
        %v280 = vld [vmem:[%s279] sm:$0xf]
        %v281 = vld [vmem:[%s279 + $0x4] sm:$0xf]
        %v282 = vunpack.c.l.bf16 %v280
        %v283 = vunpack.c.l.bf16 %v281
        %v284 = vstv %s278
        %v285 = vmul.f32 %v284, %v282
        %v286 = vmul.f32 %v284, %v283
        %v287 = vadd.f32 %v275, %v285
        %v288 = vadd.f32 %v276, %v286
        %s289 = sadd.s32 %s256, 3
        %s290 = sld [smem:[#allocation5 + %s289]]
        %s291 = scalar_lea.vmem %s2, 24
        %v292 = vld [vmem:[%s291] sm:$0xf]
        %v293 = vld [vmem:[%s291 + $0x4] sm:$0xf]
        %v294 = vunpack.c.l.bf16 %v292
        %v295 = vunpack.c.l.bf16 %v293
        %v296 = vstv %s290
        %v297 = vmul.f32 %v296, %v294
        %v298 = vmul.f32 %v296, %v295
        %v299 = vadd.f32 %v287, %v297
        %v300 = vadd.f32 %v288, %v298
        %v301 = vpack.c.bf16 %v300, %v299
        %s302 = smul.u32 %s29, 128
        %s303 = sld [smem:[#allocation5 + %s302]]
        %v304 = vstv %s303
        %v305 = vmul.f32 %v304, %v260
        %v306 = vmul.f32 %v304, %v261
        %s307 = sadd.s32 %s302, 1
        %s308 = sld [smem:[#allocation5 + %s307]]
        %v309 = vstv %s308
        %v310 = vmul.f32 %v309, %v270
        %v311 = vmul.f32 %v309, %v271
        %v312 = vadd.f32 %v305, %v310
        %v313 = vadd.f32 %v306, %v311
        %s314 = sadd.s32 %s302, 2
        %s315 = sld [smem:[#allocation5 + %s314]]
        %v316 = vstv %s315
        %v317 = vmul.f32 %v316, %v282
        %v318 = vmul.f32 %v316, %v283
        %v319 = vadd.f32 %v312, %v317
        %v320 = vadd.f32 %v313, %v318
        %s321 = sadd.s32 %s302, 3
        %s322 = sld [smem:[#allocation5 + %s321]]
        %v323 = vstv %s322
        %v324 = vmul.f32 %v323, %v294
        %v325 = vmul.f32 %v323, %v295
        %v326 = vadd.f32 %v319, %v324
        %v327 = vadd.f32 %v320, %v325
        %v328 = vpack.c.bf16 %v327, %v326
        %vm329 = vcmask 130048
        %v331 = vsel %vm329, %v301, 0
        %333 = vmatprep.subr.bf16.mxu0 0
        %334 = vmatpush1.bf16.msra.mxu0 0
        %335 = vmatprep.subr.bf16.mxu0 0
        %336 = vmatpush1.bf16.msra.mxu0 0
        %337 = vmatprep.subr.bf16.mxu0 0
        %338 = vmatpush1.bf16.msra.mxu0 0
        %339 = vmatprep.subr.bf16.mxu0 0
        %340 = vmatpush1.bf16.msra.mxu0 0
        %341 = vmatprep.subr.bf16.mxu0 0
        %342 = vmatpush1.bf16.msra.mxu0 0
        %343 = vmatprep.subr.bf16.mxu0 0
        %344 = vmatpush1.bf16.msra.mxu0 0
        %345 = vmatprep.subr.bf16.mxu0 0
        %346 = vmatpush1.bf16.msra.mxu0 0
        %347 = vmatprep.subr.bf16.mxu0 0
        %348 = vmatpush1.bf16.msra.mxu0 %v328
        %349 = vmatprep.subr.bf16.mxu0 0
        %350 = vmatpush2.bf16.msra.mxu0 0
        %351 = vmatprep.subr.bf16.mxu0 0
        %352 = vmatpush2.bf16.msra.mxu0 0
        %353 = vmatprep.subr.bf16.mxu0 0
        %354 = vmatpush2.bf16.msra.mxu0 0
        %355 = vmatprep.subr.bf16.mxu0 0
        %356 = vmatpush2.bf16.msra.mxu0 0
        %357 = vmatprep.subr.bf16.mxu0 0
        %358 = vmatpush2.bf16.msra.mxu0 0
        %359 = vmatprep.subr.bf16.mxu0 0
        %360 = vmatpush2.bf16.msra.mxu0 0
        %361 = vmatprep.subr.bf16.mxu0 0
        %362 = vmatpush2.bf16.msra.mxu0 0
        %363 = vmatprep.subr.bf16.mxu0 0
        %364 = vmatpush2.bf16.msra.mxu0 0
        %365 = vmatprep.mubr.bf16.mxu0 0
        %366 = vmatmul.mubr.bf16.gmra.mxu0 %v331
        %v367 = vpop.f32.mrf.mxu0
        %v368 = vadd.f32 0.0, %v367
        %v369 = vpop.f32.mrf.mxu0
        %v370 = vpop.f32.mrf.mxu0
        %v371 = vadd.f32 0.0, %v370
        %v372 = vpop.f32.mrf.mxu0
        %373 = vdwg.mxu0
        %s374 = sadd.s32 %s29, 4
        %s375 = smul.u32 %s374, 128
        %s376 = sld [smem:[#allocation5 + %s375]]
        %v377 = vstv %s376
        %v378 = vmul.f32 %v377, %v260
        %v379 = vmul.f32 %v377, %v261
        %s380 = sadd.s32 %s375, 1
        %s381 = sld [smem:[#allocation5 + %s380]]
        %v382 = vstv %s381
        %v383 = vmul.f32 %v382, %v270
        %v384 = vmul.f32 %v382, %v271
        %v385 = vadd.f32 %v378, %v383
        %v386 = vadd.f32 %v379, %v384
        %s387 = sadd.s32 %s375, 2
        %s388 = sld [smem:[#allocation5 + %s387]]
        %v389 = vstv %s388
        %v390 = vmul.f32 %v389, %v282
        %v391 = vmul.f32 %v389, %v283
        %v392 = vadd.f32 %v385, %v390
        %v393 = vadd.f32 %v386, %v391
        %s394 = sadd.s32 %s375, 3
        %s395 = sld [smem:[#allocation5 + %s394]]
        %v396 = vstv %s395
        %v397 = vmul.f32 %v396, %v294
        %v398 = vmul.f32 %v396, %v295
        %v399 = vadd.f32 %v392, %v397
        %v400 = vadd.f32 %v393, %v398
        %v401 = vpack.c.bf16 %v400, %v399
        %v402 = vsel %vm253, 0.0, %v368
        %v403 = vsel %vm254, 0.0, %v371
        %v404 = vsel %vm329, %v402, 0.0
        %405 = vadd.xlane.f32.xlu0 %v404
        %v406 = vpop.xlane.xlu0 %405
        %v407 = vsel %vm329, %v403, 0.0
        %408 = vadd.xlane.f32.xlu0 %v407
        %v409 = vpop.xlane.xlu0 %408
        %vm410 = vcmp.eq.f32.partialorder %v406, 0.0
        %vm411 = vcmp.eq.f32.partialorder %v409, 0.0
        %v412 = vsel %vm410, 1.0, %v406
        %v413 = vsel %vm411, 1.0, %v409
        %v414 = vrcp.pop %v412
        %v415 = vmul.f32 1.0, %v414
        %v416 = vrcp.pop %v413
        %v417 = vmul.f32 1.0, %v416
        %v418 = vsel %vm410, 0.0, %v415
        %v419 = vsel %vm411, 0.0, %v417
        %v420 = vmul.f32 %v402, %v418
        %v421 = vmul.f32 %v403, %v419
        %v422 = vpack.c.bf16 %v421, %v420
        %v424 = vsel %vm329, %v401, 0
        %426 = vmatprep.subr.bf16.mxu0 0
        %427 = vmatpush1.bf16.msra.mxu0 0
        %428 = vmatprep.subr.bf16.mxu0 0
        %429 = vmatpush1.bf16.msra.mxu0 0
        %430 = vmatprep.subr.bf16.mxu0 0
        %431 = vmatpush1.bf16.msra.mxu0 0
        %432 = vmatprep.subr.bf16.mxu0 0
        %433 = vmatpush1.bf16.msra.mxu0 0
        %434 = vmatprep.subr.bf16.mxu0 0
        %435 = vmatpush1.bf16.msra.mxu0 0
        %436 = vmatprep.subr.bf16.mxu0 0
        %437 = vmatpush1.bf16.msra.mxu0 0
        %438 = vmatprep.subr.bf16.mxu0 0
        %439 = vmatpush1.bf16.msra.mxu0 0
        %440 = vmatprep.subr.bf16.mxu0 0
        %441 = vmatpush1.bf16.msra.mxu0 %v422
        %442 = vmatprep.subr.bf16.mxu0 0
        %443 = vmatpush2.bf16.msra.mxu0 0
        %444 = vmatprep.subr.bf16.mxu0 0
        %445 = vmatpush2.bf16.msra.mxu0 0
        %446 = vmatprep.subr.bf16.mxu0 0
        %447 = vmatpush2.bf16.msra.mxu0 0
        %448 = vmatprep.subr.bf16.mxu0 0
        %449 = vmatpush2.bf16.msra.mxu0 0
        %450 = vmatprep.subr.bf16.mxu0 0
        %451 = vmatpush2.bf16.msra.mxu0 0
        %452 = vmatprep.subr.bf16.mxu0 0
        %453 = vmatpush2.bf16.msra.mxu0 0
        %454 = vmatprep.subr.bf16.mxu0 0
        %455 = vmatpush2.bf16.msra.mxu0 0
        %456 = vmatprep.subr.bf16.mxu0 0
        %457 = vmatpush2.bf16.msra.mxu0 0
        %458 = vmatprep.mubr.bf16.mxu0 0
        %459 = vmatmul.mubr.bf16.gmra.mxu0 %v424
        %v460 = vpop.f32.mrf.mxu0
        %v461 = vadd.f32 0.0, %v460
        %v462 = vpop.f32.mrf.mxu0
        %v463 = vpop.f32.mrf.mxu0
        %v464 = vadd.f32 0.0, %v463
        %v465 = vpop.f32.mrf.mxu0
        %466 = vdwg.mxu0
        %v467 = vsel %vm253, 1.0, %v461
        %v468 = vsel %vm254, 1.0, %v464
        %v469 = vsel %vm329, %v467, 0.0
        %470 = vadd.xlane.f32.xlu0 %v469
        %v471 = vpop.xlane.xlu0 %470
        %v472 = vsel %vm329, %v468, 0.0
        %473 = vadd.xlane.f32.xlu0 %v472
        %v474 = vpop.xlane.xlu0 %473
        %vm475 = vcmp.eq.f32.partialorder %v471, 0.0
        %vm476 = vcmp.eq.f32.partialorder %v474, 0.0
        %v477 = vsel %vm475, 1.0, %v471
        %v478 = vsel %vm476, 1.0, %v474
        %v479 = vrcp.pop %v477
        %v480 = vmul.f32 1.0, %v479
        %v481 = vrcp.pop %v478
        %v482 = vmul.f32 1.0, %v481
        %v483 = vsel %vm475, 0.0, %v480
        %v484 = vsel %vm476, 0.0, %v482
        %v485 = vmul.f32 %v467, %v483
        %v486 = vmul.f32 %v468, %v484
        %v487 = vpack.c.bf16 %v486, %v485
        %v489 = vsel %vm329, %v487, 0
        %491 = vmatprep.subr.bf16.mxu0 0
        %492 = vmatpush1.bf16.msra.mxu0 0
        %493 = vmatprep.subr.bf16.mxu0 0
        %494 = vmatpush1.bf16.msra.mxu0 0
        %495 = vmatprep.subr.bf16.mxu0 0
        %496 = vmatpush1.bf16.msra.mxu0 0
        %497 = vmatprep.subr.bf16.mxu0 0
        %498 = vmatpush1.bf16.msra.mxu0 0
        %499 = vmatprep.subr.bf16.mxu0 0
        %500 = vmatpush1.bf16.msra.mxu0 0
        %501 = vmatprep.subr.bf16.mxu0 0
        %502 = vmatpush1.bf16.msra.mxu0 0
        %503 = vmatprep.subr.bf16.mxu0 0
        %504 = vmatpush1.bf16.msra.mxu0 0
        %505 = vmatprep.subr.bf16.mxu0 0
        %506 = vmatpush1.bf16.msra.mxu0 %v247
        %507 = vmatprep.subr.bf16.mxu0 0
        %508 = vmatpush2.bf16.msra.mxu0 0
        %509 = vmatprep.subr.bf16.mxu0 0
        %510 = vmatpush2.bf16.msra.mxu0 0
        %511 = vmatprep.subr.bf16.mxu0 0
        %512 = vmatpush2.bf16.msra.mxu0 0
        %513 = vmatprep.subr.bf16.mxu0 0
        %514 = vmatpush2.bf16.msra.mxu0 0
        %515 = vmatprep.subr.bf16.mxu0 0
        %516 = vmatpush2.bf16.msra.mxu0 0
        %517 = vmatprep.subr.bf16.mxu0 0
        %518 = vmatpush2.bf16.msra.mxu0 0
        %519 = vmatprep.subr.bf16.mxu0 0
        %520 = vmatpush2.bf16.msra.mxu0 0
        %521 = vmatprep.subr.bf16.mxu0 0
        %522 = vmatpush2.bf16.msra.mxu0 0
        %523 = vmatprep.mubr.bf16.mxu0 0
        %524 = vmatmul.mubr.bf16.gmra.mxu0 %v489
        %v525 = vpop.f32.mrf.mxu0
        %v526 = vadd.f32 0.0, %v525
        %v527 = vpop.f32.mrf.mxu0
        %v528 = vpop.f32.mrf.mxu0
        %v529 = vadd.f32 0.0, %v528
        %v530 = vpop.f32.mrf.mxu0
        %531 = vdwg.mxu0
        %v532 = vmax.f32 %v526, 0.0
        %v533 = vmax.f32 %v529, 0.0
        %534 = vst.msk [vmem:[#allocation2] sm:$0xff] %vm165, %v532
        %535 = vst.msk [vmem:[#allocation2 + $0x8] sm:$0xff] %vm165, %v533
        %s536 = sld [smem:[#allocation4]]
        %s537 = scalar_lea.vmem [#allocation2], %s536
        %v538 = vld [vmem:[%s537] sm:$0x1]
        %vm539 = vcmask 57344
        %540 = vst.msk [vmem:[%s160] sm:$0x1] %vm539, %v538
        %s541 = sld [smem:[#allocation4 + $0x1]]
        %s542 = scalar_lea.vmem [#allocation2], %s541
        %v543 = vld [vmem:[%s542] sm:$0x1]
        %544 = vst.msk [vmem:[%s160 + $0x1] sm:$0x1] %vm539, %v543
        %s545 = sld [smem:[#allocation4 + $0x2]]
        %s546 = scalar_lea.vmem [#allocation2], %s545
        %v547 = vld [vmem:[%s546] sm:$0x1]
        %548 = vst.msk [vmem:[%s160 + $0x2] sm:$0x1] %vm539, %v547
        %s549 = sld [smem:[#allocation4 + $0x3]]
        %s550 = scalar_lea.vmem [#allocation2], %s549
        %v551 = vld [vmem:[%s550] sm:$0x1]
        %552 = vst.msk [vmem:[%s160 + $0x3] sm:$0x1] %vm539, %v551
        %s553 = sand.u32 %s100, 1
        %s554 = scalar_lea.sflag [#allocation7], %s553
        %s555 = sand.u32 %s100, 1
        %s556 = smul.addr %s555, 4
        %s557 = scalar_lea.vmem [#allocation6], %s556
        // Predicated region
        $region33: #{tpu_custom_call.1} parent=31 // pred_check
          %p558 = pneg %p110
        $region34: #{tpu_custom_call.1} parent=31 // pred_check_branch
          %560 = sbr.rel (%p558) target = $region36
        $region35: #{tpu_custom_call.1} parent=31 // pred_region
          %s562 = ssub.s32 64, 64
          %563 = vsyncadd %s554, %s562
          %s564 = smul.addr %s29, 64
          %s565 = scalar_lea.hbm %s5, %s564
          %s567 = sshll.u32 %s557, 4
          %s568 = int_to_ptr.vmem [resolvable:$true] %s567
          %570 = dma.vmem_to_hbm [thread:$0]  %s568, 64, %s565, %s554
        $region36: #{tpu_custom_call.1} parent=31 // pred_fallthru
          _
      $region32: #{tpu_custom_call.1} parent=5 // pred_fallthru
        _
      %p571 = scmp.le.s32.totalorder 2, %s24
      // Predicated region
      $region37: #{tpu_custom_call.1} parent=5 // pred_check
        %p572 = pneg %p571
      $region38: #{tpu_custom_call.1} parent=5 // pred_check_branch
        %574 = sbr.rel (%p572) target = $region40
      $region39: #{tpu_custom_call.1} parent=5 // pred_region
        %s575 = ssub.s32 %s24, 2
        // Predicated region
        $region41: #{tpu_custom_call.1} parent=39 // pred_check
          %p576 = pneg %p116
        $region42: #{tpu_custom_call.1} parent=39 // pred_check_branch
          %578 = sbr.rel (%p576) target = $region44
        $region43: #{tpu_custom_call.1} parent=39 // pred_region
          %s579 = sand.u32 %s101, 1
          %s580 = scalar_lea.sflag [#allocation7], %s579
          %s581 = sand.u32 %s101, 1
          %s582 = smul.addr %s581, 4
          %s583 = scalar_lea.vmem [#allocation6], %s582
          %584 = dma.done %s580, 64
        $region44: #{tpu_custom_call.1} parent=39 // pred_fallthru
          _
      $region40: #{tpu_custom_call.1} parent=5 // pred_fallthru
        _
    $region6: #{tpu_custom_call.1} parent=1 // loop_footer
      %s28 = sadd.s32 1, %s24
    $region7: #{tpu_custom_call.1} parent=1 // loop_footer_branch
      %23 = sbr.rel target = $region3
    $region8: #{tpu_custom_call.1} parent=1 // loop_exit
      _
    %585 = vsyncpa [#allocation7], 1
    %s586 = scalar_lea.sflag [#allocation7], 1
    %587 = vsyncpa %s586, 1

</llo_original>
